<compile_context>
chip_gen: v6e
topology: v6e:2x2x1
jax: 0.10.0
libtpu: 0.0.40
codegen_flags: <defaults>
</compile_context>

<pallas_src>
import functools

import jax
import jax.numpy as jnp
from jax import lax
from jax.experimental import pallas as pl
from jax.experimental.pallas import tpu as pltpu


def _csam_kernel(gamma_ref, x_ref, o_ref, acc_ref, attn_ref, *cache_refs,
                 bb, C, hw_tile, mxu_dtype, approx_recip, cache_x):
    """Two-phase CSAM body.

    acc_ref : (bbC, bbC) f32 Gram/energy accumulator (phase 0 only).
    attn_ref: (bbC, bbC) mxu_dtype attention matrix, written once in the
              softmax finalize, read every phase-1 tile.
    cache_refs: optional (bbC, hw_pad) VMEM copy of x so phase 1 never
              re-reads x from HBM.
    """
    bbC = bb * C
    phase = pl.program_id(1)
    t = pl.program_id(2)
    nt = pl.num_programs(2)

    @pl.when((phase == 0) & (t == 0))
    def _init():
        acc_ref[...] = jnp.zeros_like(acc_ref)

    @pl.when(phase == 0)
    def _accumulate_energy():
        xt = x_ref[0]                                     # (bbC, hw_tile)
        if cache_x:
            off = pl.multiple_of(t * hw_tile, 128)
            cache_refs[0][:, pl.ds(off, hw_tile)] = xt
        xb = xt.astype(mxu_dtype)
        # Gram update: contract the trailing HW dim of both operands directly
        # (standard Q @ K^T MXU feed, no materialized transpose), f32 acc.
        acc_ref[...] += lax.dot_general(
            xb, xb, dimension_numbers=(((1,), (1,)), ((), ())),
            preferred_element_type=jnp.float32)

    @pl.when((phase == 0) & (t == nt - 1))
    def _softmax():
        e = acc_ref[...]                                  # (bbC, bbC) f32
        if bb > 1:
            # bb batch elements are packed into one Gram; only the
            # block-diagonal (per-batch) entries are real attention logits.
            row = lax.broadcasted_iota(jnp.int32, (bbC, bbC), 0) // C
            col = lax.broadcasted_iota(jnp.int32, (bbC, bbC), 1) // C
            e = jnp.where(row == col, e, jnp.inf)
        # softmax(rowmax(E) - E) == softmax(-E); the stable form needs a
        # single row reduction: p = exp(rowmin(E) - E).  Masked (off-block)
        # entries become exp(-inf) == 0 exactly.
        p = jnp.exp(jnp.min(e, axis=-1, keepdims=True) - e)
        denom = jnp.sum(p, axis=-1, keepdims=True)
        # Cast the attention matrix to the MXU dtype exactly once; phase 1
        # then streams it into the MXU without per-tile f32 re-read/re-cast.
        attn_ref[...] = (p * pl.reciprocal(denom, approx=approx_recip)
                         ).astype(attn_ref.dtype)

    @pl.when(phase == 1)
    def _apply():
        if cache_x:
            off = pl.multiple_of(t * hw_tile, 128)
            xt = cache_refs[0][:, pl.ds(off, hw_tile)]
        else:
            xt = x_ref[0]
        out = jnp.dot(attn_ref[...], xt.astype(mxu_dtype),
                      preferred_element_type=jnp.float32)
        gamma = gamma_ref[0]
        # x * (gamma * out) + x  ==  x * (gamma * out + 1)
        o_ref[0] = (xt.astype(jnp.float32) * (gamma * out + 1.0)
                    ).astype(o_ref.dtype)


def _round_up(a, m):
    return -(-a // m) * m


def _vmem_capacity_bytes():
    try:
        return int(pltpu.get_tpu_info().vmem_capacity_bytes)
    except Exception:
        return 64 * 1024 * 1024        # conservative: v7x per-TensorCore VMEM


def _plan(B, C, HW, x_itemsize, mxu_itemsize):
    """Generation-aware tiling plan.  Returns None if the resident attention
    matrix + a 256-lane pipeline can't fit VMEM (caller falls back to XLA)."""
    vmem_cap = _vmem_capacity_bytes()
    # ~85% of physical VMEM: ~109 MiB on 128 MiB v5e/v6e, ~54 MiB on 64 MiB v7x.
    vmem_limit = int(vmem_cap * 0.85)
    # 64 MiB/TensorCore parts (v7x) have 2 TCs; keep >= 2 parallel batch blocks.
    two_cores = vmem_cap <= 96 * 1024 * 1024

    # Batch-block packing for small C: flattening bb*C channels into one Gram
    # actually fills MXU rows (a batched tiny einsum does not) and amortizes
    # the ~0.35us/step grid overhead.
    bb_cap = B
    if two_cores and B >= 2:
        bb_cap = max(1, B // 2)
    bb = 1
    if C < 128:
        for k in range(1, bb_cap + 1):
            if B % k == 0 and k * C <= 512:
                bb = k
    bbC = bb * C
    nb = B // bb

    acc_bytes = bbC * bbC * 4
    attn_bytes = bbC * bbC * mxu_itemsize
    headroom = 4 * 1024 * 1024
    # Streamed bytes per lane column: x tile + o tile (each double buffered)
    # plus in-kernel bf16 cast and two f32 temporaries (matmul out, residual).
    lane_cost = bbC * (4 * x_itemsize + mxu_itemsize + 8)

    avail = vmem_limit - acc_bytes - attn_bytes - headroom
    if avail < 256 * lane_cost:
        # Try the full physical VMEM before giving up (256-lane floor:
        # 128-lane tiles measured at ~29% of HBM roofline).
        vmem_limit = vmem_cap - 2 * 1024 * 1024
        avail = vmem_limit - acc_bytes - attn_bytes - headroom
        if avail < 256 * lane_cost:
            return None

    hw_pad128 = _round_up(HW, 128)
    hw_tile = max(128, min((avail // lane_cost) // 128 * 128, 8192, hw_pad128))
    nt = -(-hw_pad128 // hw_tile)
    hw_tile = _round_up(-(-hw_pad128 // nt), 128)
    hw_pad = nt * hw_tile

    # Cache x in VMEM during phase 0 so phase 1 never re-reads it from HBM
    # (removes 1/3 of the HBM traffic; dominant lever on mem-bound v6e/v7x
    # shapes) -- but only if the streamed tile can stay large (>= 1024 lanes
    # or the already-chosen tile), so compute-bound v5e shapes keep big tiles.
    cache_x = False
    if nt > 1:
        for cand in sorted({hw_tile, 2048, 1024, 512}, reverse=True):
            if cand > hw_tile:
                continue
            nt_c = -(-hw_pad128 // cand)
            tile_c = _round_up(-(-hw_pad128 // nt_c), 128)
            pad_c = nt_c * tile_c
            if (tile_c >= min(1024, hw_tile)
                    and avail >= lane_cost * tile_c + bbC * pad_c * x_itemsize):
                cache_x = True
                hw_tile, nt, hw_pad = tile_c, nt_c, pad_c
                break

    return dict(bb=bb, bbC=bbC, nb=nb, hw_tile=hw_tile, nt=nt, hw_pad=hw_pad,
                cache_x=cache_x, vmem_limit=int(vmem_limit))


def csam_forward(x, gamma, *, mxu_dtype=jnp.bfloat16, approx_recip=True):
    """CSAM forward.  x: (B, C, H, W); gamma: shape-(1,) scalar parameter."""
    B, C, H, W = x.shape
    HW = H * W
    x_itemsize = jnp.dtype(x.dtype).itemsize
    plan = _plan(B, C, HW, x_itemsize, jnp.dtype(mxu_dtype).itemsize)
    if plan is None:
        # Resident (C, C) attention doesn't fit this generation's VMEM.
        return csam_reference(x, gamma)

    bb, bbC, nb = plan["bb"], plan["bbC"], plan["nb"]
    hw_tile, nt, hw_pad = plan["hw_tile"], plan["nt"], plan["hw_pad"]
    cache_x = plan["cache_x"]

    x_flat = x.reshape(B, C, HW)
    if hw_pad != HW:
        # Zero padding is exact: zeros add nothing to the Gram matrix and the
        # padded output columns are sliced away below.
        x_flat = jnp.pad(x_flat, ((0, 0), (0, 0), (0, hw_pad - HW)))
    # Free (row-major) reshape: pack bb batch elements into the channel axis.
    x_pack = x_flat.reshape(nb, bbC, hw_pad)

    gamma = jnp.asarray(gamma, jnp.float32).reshape((1,))

    kernel = functools.partial(
        _csam_kernel, bb=bb, C=C, hw_tile=hw_tile,
        mxu_dtype=mxu_dtype, approx_recip=approx_recip, cache_x=cache_x)

    if cache_x:
        # Phase 1 reads the VMEM cache: input window parks on the last tile
        # (no phase-1 input DMA at all); output walks forward.
        x_map = lambda b, p, t: (b, 0, t * (1 - p) + (nt - 1) * p)
        o_map = lambda b, p, t: (b, 0, t * p)
    else:
        # No cache: phase 1 walks tiles in REVERSE so its first tile is the
        # one already resident from the end of phase 0 (saves one tile DMA and
        # hides the softmax bubble).  Output parks on the tile phase 1 writes
        # first, so no never-written block is ever flushed.
        x_map = lambda b, p, t: (b, 0, t + p * (nt - 1 - 2 * t))
        o_map = lambda b, p, t: (b, 0, (nt - 1) - t * p)

    scratch = [pltpu.VMEM((bbC, bbC), jnp.float32),     # energy accumulator
               pltpu.VMEM((bbC, bbC), mxu_dtype)]       # attn, cast once
    if cache_x:
        scratch.append(pltpu.VMEM((bbC, hw_pad), x.dtype))

    x_reads = 1 if (cache_x or nt == 1) else 2
    cost = pl.CostEstimate(
        flops=4 * nb * bbC * bbC * hw_pad,              # two (bbC,bbC,HW) matmuls
        transcendentals=nb * bbC * bbC,                 # softmax exp
        bytes_accessed=(x_reads + 1) * nb * bbC * hw_pad * x_itemsize
                       + nb * bbC * bbC * 4)

    out_pack = pl.pallas_call(
        kernel,
        out_shape=jax.ShapeDtypeStruct((nb, bbC, hw_pad), x.dtype),
        grid_spec=pltpu.PrefetchScalarGridSpec(
            num_scalar_prefetch=0,
            grid=(nb, 2, nt),                 # batch blocks, phase, HW tiles
            in_specs=[
                pl.BlockSpec(memory_space=pltpu.MemorySpace.SMEM),   # gamma
                pl.BlockSpec((1, bbC, hw_tile), x_map),
            ],
            out_specs=pl.BlockSpec((1, bbC, hw_tile), o_map),
            scratch_shapes=scratch,
        ),
        compiler_params=pltpu.CompilerParams(
            dimension_semantics=("parallel", "arbitrary", "arbitrary"),
            vmem_limit_bytes=plan["vmem_limit"],
        ),
        cost_estimate=cost,
    )(gamma, x_pack)

    out_flat = out_pack.reshape(B, C, hw_pad)
    if hw_pad != HW:
        out_flat = out_flat[:, :, :HW]
    return out_flat.reshape(B, C, H, W)


def csam_reference(x, gamma, *, matmul_dtype=None):
    """Pure-JAX reference.  matmul_dtype mirrors the kernel's MXU input cast."""
    B, C, H, W = x.shape
    q = x.reshape(B, C, H * W)
    qm = q if matmul_dtype is None else q.astype(matmul_dtype)
    energy = jnp.einsum("bcn,bdn->bcd", qm, qm,
                        preferred_element_type=jnp.float32)
    energy_new = jnp.max(energy, axis=-1, keepdims=True) - energy
    attn = jax.nn.softmax(energy_new, axis=-1)
    if matmul_dtype is not None:
        attn = attn.astype(matmul_dtype)
    out = jnp.einsum("bcd,bdn->bcn", attn, qm,
                     preferred_element_type=jnp.float32)
    g = jnp.asarray(gamma, jnp.float32).reshape(())
    out = (g * out).reshape(B, C, H, W)
    return x * out + x


if __name__ == "__main__":
    key = jax.random.PRNGKey(0)
    B, C, H, W = 2, 4, 16, 16
    x = jax.random.normal(key, (B, C, H, W), dtype=jnp.float32)

    # Parameter init per the module's __init__: gamma = zeros(1).
    gamma0 = jnp.zeros((1,), jnp.float32)
    y0 = jax.block_until_ready(csam_forward(x, gamma0))
    assert jnp.allclose(y0, csam_reference(x, gamma0), atol=1e-5, rtol=1e-5)

    # Non-trivial gamma so the attention path is actually exercised.
    gamma = jnp.array([0.5], jnp.float32)

    # Exact-math validation: f32 MXU inputs + exact reciprocal.
    y_exact = jax.block_until_ready(
        csam_forward(x, gamma, mxu_dtype=jnp.float32, approx_recip=False))
    assert jnp.allclose(y_exact, csam_reference(x, gamma),
                        atol=1e-3, rtol=1e-3)

    # Default fast path (bf16 MXU inputs, approx reciprocal) against a
    # bf16-matched reference; tolerance also covers the approx reciprocal.
    y_fast = jax.block_until_ready(csam_forward(x, gamma))
    ref_bf16 = csam_reference(x, gamma, matmul_dtype=jnp.bfloat16)
    assert jnp.allclose(y_fast, ref_bf16, atol=2e-2, rtol=2e-2)

    print("KERNEL_OK")
</pallas_src>

<mosaic_0001>
module attributes {stable_mosaic.version = 11 : i64} {
  func.func @_csam_kernel(%arg0: i32, %arg1: i32, %arg2: i32, %arg3: memref<1xf32, #tpu.memory_space<smem>>, %arg4: memref<1x4x256xf32, #tpu.memory_space<vmem>>, %arg5: memref<1x4x256xf32, #tpu.memory_space<vmem>>, %arg6: memref<4x4xf32, #tpu.memory_space<vmem>>, %arg7: memref<4x4xbf16, #tpu.memory_space<vmem>>) attributes {dimension_semantics = [#tpu.dimension_semantics<parallel>, #tpu.dimension_semantics<arbitrary>, #tpu.dimension_semantics<arbitrary>], iteration_bounds = array<i64: 2, 2, 1>, scalar_prefetch = 0 : i64, scratch_operands = 2 : i64, tpu.core_type = #tpu.core_type<tc>, window_params = [{transform_indices = @transform_0, window_bounds = array<i64: 1>}, {transform_indices = @transform_1, window_bounds = array<i64: 1, 4, 256>}, {transform_indices = @transform_2, window_bounds = array<i64: 1, 4, 256>}]} {
    %c0_i32 = arith.constant 0 : i32
    %0 = arith.cmpi eq, %arg1, %c0_i32 : i32
    %c0_i32_0 = arith.constant 0 : i32
    %1 = arith.cmpi eq, %arg2, %c0_i32_0 : i32
    %2 = arith.andi %0, %1 : i1
    %3 = arith.extui %2 : i1 to i32
    %c0_i32_1 = arith.constant 0 : i32
    %4 = arith.cmpi ne, %3, %c0_i32_1 : i32
    scf.if %4 {
      %cst = arith.constant 0.000000e+00 : f32
      %16 = vector.broadcast %cst : f32 to vector<4x4xf32>
      %c0 = arith.constant 0 : index
      %c0_8 = arith.constant 0 : index
      %17 = vector.load %arg6[%c0, %c0_8] : memref<4x4xf32, #tpu.memory_space<vmem>>, vector<4x4xf32>
      tpu.vector_store %arg6[%c0, %c0_8], %16 {strides = array<i32>} : memref<4x4xf32, #tpu.memory_space<vmem>>, vector<4x4xf32>,
    } else {
    }
    %c0_i32_2 = arith.constant 0 : i32
    %5 = arith.cmpi eq, %arg1, %c0_i32_2 : i32
    %6 = arith.extui %5 : i1 to i32
    %c0_i32_3 = arith.constant 0 : i32
    %7 = arith.cmpi ne, %6, %c0_i32_3 : i32
    scf.if %7 {
      %c0 = arith.constant 0 : index
      %c0_8 = arith.constant 0 : index
      %c0_9 = arith.constant 0 : index
      %16 = vector.load %arg4[%c0, %c0_8, %c0_9] : memref<1x4x256xf32, #tpu.memory_space<vmem>>, vector<1x4x256xf32>
      %17 = vector.shape_cast %16 : vector<1x4x256xf32> to vector<4x256xf32>
      %18 = arith.truncf %17 : vector<4x256xf32> to vector<4x256xbf16>
      %c0_10 = arith.constant 0 : index
      %c0_11 = arith.constant 0 : index
      %19 = vector.load %arg6[%c0_10, %c0_11] : memref<4x4xf32, #tpu.memory_space<vmem>>, vector<4x4xf32>
      %cst = arith.constant dense<0.000000e+00> : vector<4x4xf32>
      %20 = tpu.matmul %18, %18, %cst {dimension_numbers = #tpu.dot_dimension_numbers<[1], [1], [0], [0], [0, 0, 1, 0], [], []>} : vector<4x256xbf16>, vector<4x256xbf16>, vector<4x4xf32> -> vector<4x4xf32>
      %21 = arith.addf %19, %20 : vector<4x4xf32>
      %c0_12 = arith.constant 0 : index
      %c0_13 = arith.constant 0 : index
      %22 = vector.load %arg6[%c0_12, %c0_13] : memref<4x4xf32, #tpu.memory_space<vmem>>, vector<4x4xf32>
      tpu.vector_store %arg6[%c0_12, %c0_13], %21 {strides = array<i32>} : memref<4x4xf32, #tpu.memory_space<vmem>>, vector<4x4xf32>,
    } else {
    }
    %c0_i32_4 = arith.constant 0 : i32
    %8 = arith.cmpi eq, %arg1, %c0_i32_4 : i32
    %c0_i32_5 = arith.constant 0 : i32
    %9 = arith.cmpi eq, %arg2, %c0_i32_5 : i32
    %10 = arith.andi %8, %9 : i1
    %11 = arith.extui %10 : i1 to i32
    %c0_i32_6 = arith.constant 0 : i32
    %12 = arith.cmpi ne, %11, %c0_i32_6 : i32
    scf.if %12 {
      %c0 = arith.constant 0 : index
      %c0_8 = arith.constant 0 : index
      %16 = vector.load %arg6[%c0, %c0_8] : memref<4x4xf32, #tpu.memory_space<vmem>>, vector<4x4xf32>
      %cst = arith.constant dense<0x7F800000> : vector<4xf32>
      %17 = vector.multi_reduction <minimumf>, %16, %cst [1] : vector<4x4xf32> to vector<4xf32>
      %18 = vector.shape_cast %17 : vector<4xf32> to vector<4x1xf32>
      %19 = vector.broadcast %18 : vector<4x1xf32> to vector<4x4xf32>
      %20 = arith.subf %19, %16 : vector<4x4xf32>
      %21 = math.exp %20 : vector<4x4xf32>
      %cst_9 = arith.constant dense<0.000000e+00> : vector<4xf32>
      %22 = vector.multi_reduction <add>, %21, %cst_9 [1] : vector<4x4xf32> to vector<4xf32>
      %23 = vector.shape_cast %22 : vector<4xf32> to vector<4x1xf32>
      %24 = tpu.reciprocal %23 {approx = true} : vector<4x1xf32> -> vector<4x1xf32>
      %25 = vector.broadcast %24 : vector<4x1xf32> to vector<4x4xf32>
      %26 = arith.mulf %21, %25 : vector<4x4xf32>
      %27 = arith.truncf %26 : vector<4x4xf32> to vector<4x4xbf16>
      %c0_10 = arith.constant 0 : index
      %c0_11 = arith.constant 0 : index
      %28 = vector.load %arg7[%c0_10, %c0_11] : memref<4x4xbf16, #tpu.memory_space<vmem>>, vector<4x4xbf16>
      tpu.vector_store %arg7[%c0_10, %c0_11], %27 {strides = array<i32>} : memref<4x4xbf16, #tpu.memory_space<vmem>>, vector<4x4xbf16>,
    } else {
    }
    %c1_i32 = arith.constant 1 : i32
    %13 = arith.cmpi eq, %arg1, %c1_i32 : i32
    %14 = arith.extui %13 : i1 to i32
    %c0_i32_7 = arith.constant 0 : i32
    %15 = arith.cmpi ne, %14, %c0_i32_7 : i32
    scf.if %15 {
      %c0 = arith.constant 0 : index
      %c0_8 = arith.constant 0 : index
      %c0_9 = arith.constant 0 : index
      %16 = vector.load %arg4[%c0, %c0_8, %c0_9] : memref<1x4x256xf32, #tpu.memory_space<vmem>>, vector<1x4x256xf32>
      %17 = vector.shape_cast %16 : vector<1x4x256xf32> to vector<4x256xf32>
      %c0_10 = arith.constant 0 : index
      %c0_11 = arith.constant 0 : index
      %18 = vector.load %arg7[%c0_10, %c0_11] : memref<4x4xbf16, #tpu.memory_space<vmem>>, vector<4x4xbf16>
      %19 = arith.truncf %17 : vector<4x256xf32> to vector<4x256xbf16>
      %cst = arith.constant dense<0.000000e+00> : vector<4x256xf32>
      %20 = tpu.matmul %18, %19, %cst {dimension_numbers = #tpu.dot_dimension_numbers<[1], [0], [0], [1], [0, 0, 1, 1], [], []>} : vector<4x4xbf16>, vector<4x256xbf16>, vector<4x256xf32> -> vector<4x256xf32>
      %c0_12 = arith.constant 0 : index
      %21 = memref.load %arg3[%c0_12] : memref<1xf32, #tpu.memory_space<smem>>
      %22 = vector.broadcast %21 : f32 to vector<4x256xf32>
      %23 = arith.mulf %22, %20 : vector<4x256xf32>
      %cst_13 = arith.constant 1.000000e+00 : f32
      %24 = vector.broadcast %cst_13 : f32 to vector<4x256xf32>
      %25 = arith.addf %23, %24 : vector<4x256xf32>
      %26 = arith.mulf %17, %25 : vector<4x256xf32>
      %c0_14 = arith.constant 0 : index
      %c0_15 = arith.constant 0 : index
      %c0_16 = arith.constant 0 : index
      %27 = vector.load %arg5[%c0_14, %c0_15, %c0_16] : memref<1x4x256xf32, #tpu.memory_space<vmem>>, vector<1x4x256xf32>
      %28 = vector.shape_cast %27 : vector<1x4x256xf32> to vector<4x256xf32>
      %29 = vector.shape_cast %26 : vector<4x256xf32> to vector<1x4x256xf32>
      tpu.vector_store %arg5[%c0_14, %c0_15, %c0_16], %29 {strides = array<i32>} : memref<1x4x256xf32, #tpu.memory_space<vmem>>, vector<1x4x256xf32>,
    } else {
    }
    return
  }
  func.func @transform_0(%arg0: i32, %arg1: i32, %arg2: i32) -> i32 {
    %c0_i32 = arith.constant 0 : i32
    %c0_i32_0 = arith.constant 0 : i32
    return %c0_i32 : i32
  }
  func.func @transform_1(%arg0: i32, %arg1: i32, %arg2: i32) -> (i32, i32, i32) {
    %c2_i32 = arith.constant 2 : i32
    %0 = arith.muli %c2_i32, %arg2 : i32
    %c0_i32 = arith.constant 0 : i32
    %1 = arith.subi %c0_i32, %0 : i32
    %2 = arith.muli %arg1, %1 : i32
    %3 = arith.addi %arg2, %2 : i32
    %c0_i32_0 = arith.constant 0 : i32
    %c0_i32_1 = arith.constant 0 : i32
    return %arg0, %c0_i32_0, %3 : i32, i32, i32
  }
  func.func @transform_2(%arg0: i32, %arg1: i32, %arg2: i32) -> (i32, i32, i32) {
    %0 = arith.muli %arg2, %arg1 : i32
    %c0_i32 = arith.constant 0 : i32
    %1 = arith.subi %c0_i32, %0 : i32
    %c0_i32_0 = arith.constant 0 : i32
    %c0_i32_1 = arith.constant 0 : i32
    return %arg0, %c0_i32_0, %1 : i32, i32, i32
  }
}

</mosaic_0001>

<llo_original>
// kernel: tpu_custom_call.1
$region0: #{tpu_custom_call.1}
  #allocation0 [shape = 'u32[]', space=smem, size = 0x4, offset = 0x4, fixed_abs, tag = 'smem constant byte address 0x4 - core index']
  #allocation1 [shape = 'u32[144,128]{1,0:T(1,128)}', space=vmem, size = 0x12000, scoped, tag = 'internal scratch']
  #allocation2 [shape = 'f32[4,4]{1,0:T(4,128)}', space=vmem, size = 0x800, scoped, tag = 'scratch operand']
  #allocation3 [shape = 'bf16[4,4]{1,0:T(4,128)(2,1)}', space=vmem, size = 0x400, scoped, tag = 'scratch operand']
  #allocation4 [shape = 'f32[1]{0:T(128)S(6)}', space=smem, size = 0x200, scoped, tag = 'scoped memory for tpu_custom_call.1']
  %s0 = inlined_call_operand.<no memory space> [shape: f32[1], index: 0, kind: input, shape index: {}]
  %s1 = inlined_call_operand.hbm [shape: f32[2,4,256], index: 1, kind: input, shape index: {}]
  %s2 = inlined_call_operand.hbm [shape: f32[2,4,256], index: 2, kind: output, shape index: {}]
  %s3 = sld [smem:[#allocation0]]
  $region61: #{tpu_custom_call.1} parent=0
    _
  %s5 = ssub.s32 1, %s3
  %s6 = scalar_select 0, %s5, %s3
  %7 = sst [smem:[#allocation4]] %s0
  $region1: #{tpu_custom_call.1} parent=0
    #allocation5 [shape = 'u8[8192]{0}', space=vmem, size = 0x2000, scoped, tag = 'input window, operand 1']
    #allocation6 [shape = 's32[2]{0}', space=sflag, size = 0x8, scoped, tag = 'scoped memory for tpu_custom_call.1']
    #allocation7 [shape = 's32[2]{0}', space=sflag, size = 0x8, scoped, tag = 'scoped memory for tpu_custom_call.1']
    #allocation8 [shape = 'u8[8192]{0}', space=vmem, size = 0x2000, scoped, tag = 'output window, operand 0']
    %8 = vsyncpa [#allocation6], 0
    %s9 = scalar_lea.sflag [#allocation6], 1
    %10 = vsyncpa %s9, 0
    %11 = vsyncpa [#allocation7], 0
    %s12 = scalar_lea.sflag [#allocation7], 1
    %13 = vsyncpa %s12, 0
    loop: start=0, step=1, limit=6
    $region2: #{tpu_custom_call.1} parent=1 // loop_pre_header
      _
    $region3: #{tpu_custom_call.1} parent=1 // loop_header
      %s15 = sphi 0, %s19
      %p16 = scmp.ge.s32.totalorder %s15, 6
      %s22 = sphi 0, %s41
      %s23 = sphi 0, %s37
      %s24 = sphi 0, %s33
      %s25 = sphi 0, %s22
      %s26 = sphi 0, %s23
      %s27 = sphi 0, %s24
      %s28 = sphi 0, %s25
      %s29 = sphi 0, %s26
      %s30 = sphi 0, %s27
      %s42 = sphi 0, %s42
      %s44 = sphi 0, %s42
      %s45 = sphi 0, %s44
      %s59 = sphi 0, %s45
      %s75 = sphi 0, %s77
      %s78 = sphi 0, %s75
      %s79 = sphi 0, %s78
      %s95 = sphi 0, %s79
      %s107 = sphi 0, %s109
      %s110 = sphi 0, %s107
      %s111 = sphi 0, %s110
      %s127 = sphi 0, %s111
    $region4: #{tpu_custom_call.1} parent=1 // loop_header_branch
      %18 = sbr.rel (%p16) target = $region8
    $region5: #{tpu_custom_call.1} parent=1 // loop_body
      %s20 = ssub.s32 %s15, 1
      %s21 = ssub.s32 %s15, 2
      %s31 = sadd.s32 1, %s24
      %p32 = scmp.ge.s32.totalorder %s31, 1
      %s33 = scalar_select %p32, 0, %s31
      %s34 = sadd.s32 1, %s23
      %s35 = scalar_select %p32, %s34, %s23
      %p36 = scmp.ge.s32.totalorder %s35, 2
      %s37 = scalar_select %p36, 0, %s35
      %s38 = sadd.s32 1, %s22
      %s39 = scalar_select %p36, %s38, %s22
      %p40 = scmp.ge.s32.totalorder %s39, 2
      %s41 = scalar_select %p40, 0, %s39
      %s43 = sadd.s32 %s42, 1
      %p46 = scmp.eq.s32.totalorder %s15, 3
      %p47 = scmp.ne.s32.totalorder %s42, %s44
      %p48 = scmp.eq.s32.totalorder %s15, 0
      %p49 = por %p47, %p48
      %p50 = scmp.ne.s32.totalorder %s42, %s44
      %p51 = scmp.eq.s32.totalorder %s20, 3
      %p52 = por %p50, %p51
      %p53 = scmp.ne.s32.totalorder %s44, %s45
      %p54 = scmp.eq.s32.totalorder %s20, 0
      %p55 = por %p53, %p54
      %p56 = scmp.ne.s32.totalorder %s44, %s45
      %p57 = scmp.eq.s32.totalorder %s21, 3
      %p58 = por %p56, %p57
      %p60 = scmp.ne.s32.totalorder %s45, %s59
      %p61 = scmp.eq.s32.totalorder %s21, 0
      %p62 = por %p60, %p61
      %s63 = smul.u32 %s24, 2
      %s64 = ssub.s32 0, %s63
      %s65 = smul.u32 %s23, %s64
      %s66 = sadd.s32 %s24, %s65
      %s67 = smul.u32 %s33, 2
      %s68 = ssub.s32 0, %s67
      %s69 = smul.u32 %s37, %s68
      %s70 = sadd.s32 %s33, %s69
      %s71 = ssub.s32 %s22, %s41
      %s72 = ssub.s32 %s66, %s70
      %s73 = sor.u32 %s71, %s72
      %p74 = scmp.eq.s32.totalorder %s73, 0
      %s76 = sadd.s32 %s75, 1
      %s77 = scalar_select %p74, %s75, %s76
      %p80 = pneg %p74
      %p81 = scmp.eq.s32.totalorder %s15, 3
      %p82 = por %p80, %p81
      %p83 = scmp.ne.s32.totalorder %s75, %s78
      %p84 = scmp.eq.s32.totalorder %s15, 0
      %p85 = por %p83, %p84
      %p86 = scmp.ne.s32.totalorder %s75, %s78
      %p87 = scmp.eq.s32.totalorder %s20, 3
      %p88 = por %p86, %p87
      %p89 = scmp.ne.s32.totalorder %s78, %s79
      %p90 = scmp.eq.s32.totalorder %s20, 0
      %p91 = por %p89, %p90
      %p92 = scmp.ne.s32.totalorder %s78, %s79
      %p93 = scmp.eq.s32.totalorder %s21, 3
      %p94 = por %p92, %p93
      %p96 = scmp.ne.s32.totalorder %s79, %s95
      %p97 = scmp.eq.s32.totalorder %s21, 0
      %p98 = por %p96, %p97
      %s99 = smul.u32 %s24, %s23
      %s100 = ssub.s32 0, %s99
      %s101 = smul.u32 %s33, %s37
      %s102 = ssub.s32 0, %s101
      %s103 = ssub.s32 %s22, %s41
      %s104 = ssub.s32 %s100, %s102
      %s105 = sor.u32 %s103, %s104
      %p106 = scmp.eq.s32.totalorder %s105, 0
      %s108 = sadd.s32 %s107, 1
      %s109 = scalar_select %p106, %s107, %s108
      %p112 = pneg %p106
      %p113 = scmp.eq.s32.totalorder %s15, 3
      %p114 = por %p112, %p113
      %p115 = scmp.ne.s32.totalorder %s107, %s110
      %p116 = scmp.eq.s32.totalorder %s15, 0
      %p117 = por %p115, %p116
      %p118 = scmp.ne.s32.totalorder %s107, %s110
      %p119 = scmp.eq.s32.totalorder %s20, 3
      %p120 = por %p118, %p119
      %p121 = scmp.ne.s32.totalorder %s110, %s111
      %p122 = scmp.eq.s32.totalorder %s20, 0
      %p123 = por %p121, %p122
      %p124 = scmp.ne.s32.totalorder %s110, %s111
      %p125 = scmp.eq.s32.totalorder %s21, 3
      %p126 = por %p124, %p125
      %p128 = scmp.ne.s32.totalorder %s111, %s127
      %p129 = scmp.eq.s32.totalorder %s21, 0
      %p130 = por %p128, %p129
      %p131 = scmp.le.s32.totalorder 1, %s15
      %p132 = scmp.lt.s32.totalorder %s15, 5
      %p133 = pnand %p131, %p132
      %p134 = pneg %p133
      // Predicated region
      $region9: #{tpu_custom_call.1} parent=5 // pred_check
        _
      $region10: #{tpu_custom_call.1} parent=5 // pred_check_branch
        %136 = sbr.rel (%p133) target = $region12
      $region11: #{tpu_custom_call.1} parent=5 // pred_region
        %s137 = ssub.s32 %s15, 1
        // Predicated region
        $region13: #{tpu_custom_call.1} parent=11 // pred_check
          %p138 = pneg %p55
        $region14: #{tpu_custom_call.1} parent=11 // pred_check_branch
          %140 = sbr.rel (%p138) target = $region16
        $region15: #{tpu_custom_call.1} parent=11 // pred_region
          _
        $region16: #{tpu_custom_call.1} parent=11 // pred_fallthru
          _
      $region12: #{tpu_custom_call.1} parent=5 // pred_fallthru
        _
      %p141 = scmp.lt.s32.totalorder %s15, 4
      // Predicated region
      $region17: #{tpu_custom_call.1} parent=5 // pred_check
        %p142 = pneg %p141
      $region18: #{tpu_custom_call.1} parent=5 // pred_check_branch
        %144 = sbr.rel (%p142) target = $region20
      $region19: #{tpu_custom_call.1} parent=5 // pred_region
        // Predicated region
        $region21: #{tpu_custom_call.1} parent=19 // pred_check
          %p145 = pneg %p85
        $region22: #{tpu_custom_call.1} parent=19 // pred_check_branch
          %147 = sbr.rel (%p145) target = $region24
        $region23: #{tpu_custom_call.1} parent=19 // pred_region
          %s148 = sand.u32 %s75, 1
          %s149 = scalar_lea.sflag [#allocation6], %s148
          %s150 = sand.u32 %s75, 1
          %s151 = smul.addr %s150, 8
          %s152 = scalar_lea.vmem [#allocation5], %s151
          %s153 = smul.u32 %s24, 2
          %s154 = ssub.s32 0, %s153
          %s155 = smul.u32 %s23, %s154
          %s156 = sadd.s32 %s24, %s155
          %s157 = smul.u32 2, %s156
          %s159 = ssub.s32 128, 128
          %160 = vsyncadd %s149, %s159
          %s161 = smul.addr %s22, 2
          %s162 = sadd.s32 %s157, %s161
          %s163 = smul.addr %s162, 64
          %s164 = scalar_lea.hbm %s1, %s163
          %s166 = sshll.u32 %s152, 4
          %s167 = int_to_ptr.vmem [resolvable:$true] %s166
          %169 = dma.hbm_to_vmem [thread:$0]  %s164, 128, %s167, %s149
        $region24: #{tpu_custom_call.1} parent=19 // pred_fallthru
          _
      $region20: #{tpu_custom_call.1} parent=5 // pred_fallthru
        _
      %p170 = scmp.le.s32.totalorder 1, %s15
      %p171 = scmp.lt.s32.totalorder %s15, 5
      %p172 = pnand %p170, %p171
      %p173 = pneg %p172
      // Predicated region
      $region25: #{tpu_custom_call.1} parent=5 // pred_check
        _
      $region26: #{tpu_custom_call.1} parent=5 // pred_check_branch
        %175 = sbr.rel (%p172) target = $region28
      $region27: #{tpu_custom_call.1} parent=5 // pred_region
        %s176 = ssub.s32 %s15, 1
        %s177 = sand.u32 %s78, 1
        %s178 = scalar_lea.sflag [#allocation6], %s177
        %s179 = sand.u32 %s78, 1
        %s180 = smul.addr %s179, 8
        %s181 = scalar_lea.vmem [#allocation5], %s180
        // Predicated region
        $region29: #{tpu_custom_call.1} parent=27 // pred_check
          %p182 = pneg %p91
        $region30: #{tpu_custom_call.1} parent=27 // pred_check_branch
          %184 = sbr.rel (%p182) target = $region32
        $region31: #{tpu_custom_call.1} parent=27 // pred_region
          %185 = dma.done %s178, 128
        $region32: #{tpu_custom_call.1} parent=27 // pred_fallthru
          _
        %p186 = pneg %p55
        %p187 = pneg %p52
        %s188 = sand.u32 %s78, 1
        %s189 = scalar_lea.sflag [#allocation6], %s188
        %s190 = sand.u32 %s78, 1
        %s191 = smul.addr %s190, 8
        %s192 = scalar_lea.vmem [#allocation5], %s191
        %p193 = pneg %p91
        %p194 = pneg %p88
        %p195 = pneg %p123
        %p196 = pneg %p120
        %s197 = sand.u32 %s110, 1
        %s198 = scalar_lea.sflag [#allocation7], %s197
        %s199 = sand.u32 %s110, 1
        %s200 = smul.addr %s199, 8
        %s201 = scalar_lea.vmem [#allocation8], %s200
        %s202 = smul.u32 %s27, 2
        %s203 = ssub.s32 0, %s202
        %s204 = smul.u32 %s26, %s203
        %s205 = sadd.s32 %s27, %s204
        %s206 = smul.u32 2, %s205
        %s207 = smul.u32 %s27, %s26
        %s208 = ssub.s32 0, %s207
        %s209 = smul.u32 2, %s208
        %p211 = scmp.eq.s32.totalorder %s26, 0
        %p212 = scmp.eq.s32.totalorder %s27, 0
        %p213 = pnand %p211, %p212
        %p214 = pneg %p213
        // Predicated region
        $region33: #{tpu_custom_call.1} parent=27 // pred_check
          _
        $region34: #{tpu_custom_call.1} parent=27 // pred_check_branch
          %216 = sbr.rel (%p213) target = $region36
        $region35: #{tpu_custom_call.1} parent=27 // pred_region
          %vm217 = vcmask 27648
          %218 = vst.msk [vmem:[#allocation2] sm:$0xf] %vm217, 0.0
        $region36: #{tpu_custom_call.1} parent=27 // pred_fallthru
          _
        // Predicated region
        $region37: #{tpu_custom_call.1} parent=27 // pred_check
          %p219 = pneg %p211
        $region38: #{tpu_custom_call.1} parent=27 // pred_check_branch
          %221 = sbr.rel (%p219) target = $region40
        $region39: #{tpu_custom_call.1} parent=27 // pred_region
          %v222 = vld [vmem:[%s181] sm:$0xff]
          %v224 = vcombine.high %v222, %v222
          %v226 = vpack.c.bf16 %v222, %v222
          %v227 = vpack.c.bf16 %v224, %v224
          %v228 = vld [vmem:[#allocation2] sm:$0xf]
          %229 = vmatprep.subr.bf16.mxu0 0
          %230 = vmatpush1.bf16.xpose.msra.mxu0 0
          %231 = vmatprep.subr.bf16.mxu0 0
          %232 = vmatpush1.bf16.xpose.msra.mxu0 0
          %233 = vmatprep.subr.bf16.mxu0 0
          %234 = vmatpush1.bf16.xpose.msra.mxu0 0
          %235 = vmatprep.subr.bf16.mxu0 0
          %236 = vmatpush1.bf16.xpose.msra.mxu0 0
          %237 = vmatprep.subr.bf16.mxu0 0
          %238 = vmatpush1.bf16.xpose.msra.mxu0 0
          %239 = vmatprep.subr.bf16.mxu0 0
          %240 = vmatpush1.bf16.xpose.msra.mxu0 0
          %241 = vmatprep.subr.bf16.mxu0 0
          %242 = vmatpush1.bf16.xpose.msra.mxu0 0
          %243 = vmatprep.subr.bf16.mxu0 %v227
          %244 = vmatpush1.bf16.xpose.msra.mxu0 %v226
          %245 = vmatprep.subr.bf16.mxu0 0
          %246 = vmatpush2.bf16.xpose.msra.mxu0 0
          %247 = vmatprep.subr.bf16.mxu0 0
          %248 = vmatpush2.bf16.xpose.msra.mxu0 0
          %249 = vmatprep.subr.bf16.mxu0 0
          %250 = vmatpush2.bf16.xpose.msra.mxu0 0
          %251 = vmatprep.subr.bf16.mxu0 0
          %252 = vmatpush2.bf16.xpose.msra.mxu0 0
          %253 = vmatprep.subr.bf16.mxu0 0
          %254 = vmatpush2.bf16.xpose.msra.mxu0 0
          %255 = vmatprep.subr.bf16.mxu0 0
          %256 = vmatpush2.bf16.xpose.msra.mxu0 0
          %257 = vmatprep.subr.bf16.mxu0 0
          %258 = vmatpush2.bf16.xpose.msra.mxu0 0
          %259 = vmatprep.subr.bf16.mxu0 0
          %260 = vmatpush2.bf16.xpose.msra.mxu0 0
          %261 = vmatprep.mubr.bf16.mxu0 %v227
          %262 = vmatmul.mubr.bf16.gmra.mxu0 %v226
          %v263 = vpop.f32.mrf.mxu0
          %v264 = vadd.f32 0.0, %v263
          %v265 = vpop.f32.mrf.mxu0
          %v266 = vpop.f32.mrf.mxu0
          %v267 = vpop.f32.mrf.mxu0
          %268 = vdwg.mxu0
          %v269 = vadd.f32 %v228, %v264
          %vm270 = vcmask 27648
          %271 = vst.msk [vmem:[#allocation2] sm:$0xf] %vm270, %v269
        $region40: #{tpu_custom_call.1} parent=27 // pred_fallthru
          _
        // Predicated region
        $region41: #{tpu_custom_call.1} parent=27 // pred_check
          _
        $region42: #{tpu_custom_call.1} parent=27 // pred_check_branch
          %273 = sbr.rel (%p213) target = $region44
        $region43: #{tpu_custom_call.1} parent=27 // pred_region
          %v274 = vld [vmem:[#allocation2] sm:$0xf]
          %vm275 = vcmask 27648
          %v276 = vsel %vm275, %v274, inf
          %277 = vmin.xlane.f32.xlu0 %v276
          %v278 = vpop.xlane.xlu0 %277
          %v279 = vsub.f32 %v278, %v274
          %v280 = vmul.f32 %v279, 1.442695
          %v281 = vpow.pop %v280
          %v282 = vsel %vm275, %v281, 0.0
          %283 = vadd.xlane.f32.xlu0 %v282
          %v284 = vpop.xlane.xlu0 %283
          %v285 = vrcp.pop %v284
          %v286 = vmul.f32 %v281, %v285
          %v287 = vpack.c.bf16 %v286, %v286
          %vm288 = vcmask 25600
          %289 = vst.msk [vmem:[#allocation3] sm:$0x3] %vm288, %v287
        $region44: #{tpu_custom_call.1} parent=27 // pred_fallthru
          _
        %p290 = scmp.eq.s32.totalorder %s26, 1
        // Predicated region
        $region45: #{tpu_custom_call.1} parent=27 // pred_check
          %p291 = pneg %p290
        $region46: #{tpu_custom_call.1} parent=27 // pred_check_branch
          %293 = sbr.rel (%p291) target = $region48
        $region47: #{tpu_custom_call.1} parent=27 // pred_region
          %v294 = vld [vmem:[%s181] sm:$0xff]
          %v295 = vld [vmem:[#allocation3] sm:$0x3]
          %v297 = vcombine.high %v294, %v294
          %v299 = vpack.c.bf16 %v294, %v294
          %v300 = vpack.c.bf16 %v297, %v297
          %vm301 = vcmask 31744
          %v303 = vsel %vm301, %v295, 0
          %vm305 = vcmask 1041408
          %v307 = vsel %vm305, %v299, 0
          %v310 = vsel %vm305, %v300, 0
          %312 = vmatprep.subr.bf16.mxu0 0
          %313 = vmatpush1.bf16.msra.mxu0 0
          %314 = vmatprep.subr.bf16.mxu0 0
          %315 = vmatpush1.bf16.msra.mxu0 0
          %316 = vmatprep.subr.bf16.mxu0 0
          %317 = vmatpush1.bf16.msra.mxu0 0
          %318 = vmatprep.subr.bf16.mxu0 0
          %319 = vmatpush1.bf16.msra.mxu0 0
          %320 = vmatprep.subr.bf16.mxu0 0
          %321 = vmatpush1.bf16.msra.mxu0 0
          %322 = vmatprep.subr.bf16.mxu0 0
          %323 = vmatpush1.bf16.msra.mxu0 0
          %324 = vmatprep.subr.bf16.mxu0 0
          %325 = vmatpush1.bf16.msra.mxu0 0
          %326 = vmatprep.subr.bf16.mxu0 %v310
          %327 = vmatpush1.bf16.msra.mxu0 %v307
          %328 = vmatprep.subr.bf16.mxu0 0
          %329 = vmatpush2.bf16.msra.mxu0 0
          %330 = vmatprep.subr.bf16.mxu0 0
          %331 = vmatpush2.bf16.msra.mxu0 0
          %332 = vmatprep.subr.bf16.mxu0 0
          %333 = vmatpush2.bf16.msra.mxu0 0
          %334 = vmatprep.subr.bf16.mxu0 0
          %335 = vmatpush2.bf16.msra.mxu0 0
          %336 = vmatprep.subr.bf16.mxu0 0
          %337 = vmatpush2.bf16.msra.mxu0 0
          %338 = vmatprep.subr.bf16.mxu0 0
          %339 = vmatpush2.bf16.msra.mxu0 0
          %340 = vmatprep.subr.bf16.mxu0 0
          %341 = vmatpush2.bf16.msra.mxu0 0
          %342 = vmatprep.subr.bf16.mxu0 0
          %343 = vmatpush2.bf16.msra.mxu0 0
          %344 = vmatprep.mubr.bf16.mxu0 0
          %345 = vmatmul.mubr.bf16.gmra.mxu0 %v303
          %v346 = vpop.f32.mrf.mxu0
          %v347 = vadd.f32 0.0, %v346
          %v348 = vpop.f32.mrf.mxu0
          %v349 = vadd.f32 0.0, %v348
          %v350 = vpop.f32.mrf.mxu0
          %v351 = vpop.f32.mrf.mxu0
          %352 = vdwg.mxu0
          %s353 = sld [smem:[#allocation4]]
          %v354 = vstv %s353
          %v355 = vmul.f32 %v354, %v347
          %v356 = vmul.f32 %v354, %v349
          %v357 = vadd.f32 %v355, 1.0
          %v358 = vadd.f32 %v356, 1.0
          %v361 = vcombine.low %v357, %v358
          %v363 = vmul.f32 %v294, %v361
          %364 = vst [vmem:[%s201] sm:$0xff] %v363
        $region48: #{tpu_custom_call.1} parent=27 // pred_fallthru
          _
        %s365 = sand.u32 %s110, 1
        %s366 = scalar_lea.sflag [#allocation7], %s365
        %s367 = sand.u32 %s110, 1
        %s368 = smul.addr %s367, 8
        %s369 = scalar_lea.vmem [#allocation8], %s368
        // Predicated region
        $region49: #{tpu_custom_call.1} parent=27 // pred_check
          %p370 = pneg %p120
        $region50: #{tpu_custom_call.1} parent=27 // pred_check_branch
          %372 = sbr.rel (%p370) target = $region52
        $region51: #{tpu_custom_call.1} parent=27 // pred_region
          %s373 = smul.u32 %s27, %s26
          %s374 = ssub.s32 0, %s373
          %s375 = smul.u32 2, %s374
          %s377 = ssub.s32 128, 128
          %378 = vsyncadd %s366, %s377
          %s379 = smul.addr %s25, 2
          %s380 = sadd.s32 %s375, %s379
          %s381 = smul.addr %s380, 64
          %s382 = scalar_lea.hbm %s2, %s381
          %s384 = sshll.u32 %s369, 4
          %s385 = int_to_ptr.vmem [resolvable:$true] %s384
          %387 = dma.vmem_to_hbm [thread:$0]  %s385, 128, %s382, %s366
        $region52: #{tpu_custom_call.1} parent=27 // pred_fallthru
          _
      $region28: #{tpu_custom_call.1} parent=5 // pred_fallthru
        _
      %p388 = scmp.le.s32.totalorder 2, %s15
      // Predicated region
      $region53: #{tpu_custom_call.1} parent=5 // pred_check
        %p389 = pneg %p388
      $region54: #{tpu_custom_call.1} parent=5 // pred_check_branch
        %391 = sbr.rel (%p389) target = $region56
      $region55: #{tpu_custom_call.1} parent=5 // pred_region
        %s392 = ssub.s32 %s15, 2
        // Predicated region
        $region57: #{tpu_custom_call.1} parent=55 // pred_check
          %p393 = pneg %p126
        $region58: #{tpu_custom_call.1} parent=55 // pred_check_branch
          %395 = sbr.rel (%p393) target = $region60
        $region59: #{tpu_custom_call.1} parent=55 // pred_region
          %s396 = sand.u32 %s111, 1
          %s397 = scalar_lea.sflag [#allocation7], %s396
          %s398 = sand.u32 %s111, 1
          %s399 = smul.addr %s398, 8
          %s400 = scalar_lea.vmem [#allocation8], %s399
          %401 = dma.done %s397, 128
        $region60: #{tpu_custom_call.1} parent=55 // pred_fallthru
          _
      $region56: #{tpu_custom_call.1} parent=5 // pred_fallthru
        _
    $region6: #{tpu_custom_call.1} parent=1 // loop_footer
      %s19 = sadd.s32 1, %s15
    $region7: #{tpu_custom_call.1} parent=1 // loop_footer_branch
      %14 = sbr.rel target = $region3
    $region8: #{tpu_custom_call.1} parent=1 // loop_exit
      _
    %402 = vsyncpa [#allocation6], 1
    %s403 = scalar_lea.sflag [#allocation6], 1
    %404 = vsyncpa %s403, 1
    %405 = vsyncpa [#allocation7], 1
    %s406 = scalar_lea.sflag [#allocation7], 1
    %407 = vsyncpa %s406, 1

</llo_original>
